<compile_context>
chip_gen: v5e
topology: v5e:2x2
jax: 0.10.0
libtpu: 0.0.40
codegen_flags: <defaults>
</compile_context>

<pallas_src>
import functools

import jax
import jax.numpy as jnp
from jax.experimental import pallas as pl
from jax.experimental.pallas import tpu as pltpu

BN_EPS = 1e-5


def dwblock_kernel(x_ref, w_ref, gamma_ref, beta_ref, o_ref, *, l_valid):
    """One grid step = one channel tile, full (B, L_pad).

    x_ref:     (B, tC, Lp)  zero-padded (along L) input tile
    w_ref:     (1, tC, K)   depthwise conv weights
    gamma_ref: (1, tC, 1)   BN scale
    beta_ref:  (1, tC, 1)   BN shift
    o_ref:     (B, tC, Lp)  output tile (positions >= l_valid are don't-care)
    """
    B, tC, Lp = o_ref.shape
    K = w_ref.shape[-1]
    pad = K // 2

    x = x_ref[...].astype(jnp.float32)
    w = w_ref[...].astype(jnp.float32)

    # One tiny (1,1,Lp) lane iota shared by the K-1 edge masks and the BN
    # stats mask.  All mask work stays O(L), out of the B*tC*L hot math.
    lane = jax.lax.broadcasted_iota(jnp.int32, (1, 1, Lp), 2)

    # Depthwise conv as K shifted multiply-adds.  Shifts go to the XLU via
    # pltpu.roll; the zero-padding halo is reproduced by folding a float edge
    # mask into the per-channel tap weight (1,tC,Lp), so the hot path is a
    # single fused mul+add per tap per element on the VPU.
    acc = jnp.zeros((B, tC, Lp), jnp.float32)
    for k in range(K):                               # small static K -> unrolled
        off = k - pad                                # y[l] += w[k] * x[l + off]
        wk = w[:, :, k:k + 1]                        # (1, tC, 1)
        if off == 0:
            acc = acc + x * wk
        else:
            rolled = pltpu.roll(x, (-off) % Lp, 2)   # rolled[l] = x[(l+off) % Lp]
            valid = jnp.logical_and(lane + off >= 0, lane + off < l_valid)
            eff_w = jnp.where(valid, 1.0, 0.0) * wk  # (1, tC, Lp) edge-masked weight
            acc = acc + rolled * eff_w
    # NOTE: depthwise-conv bias intentionally omitted — it is exactly cancelled
    # by the batch-statistics mean subtraction of the following BatchNorm.

    # BatchNorm1d (training-mode): per-channel stats over (B, valid L), biased
    # variance, computed mean-shifted (tile is VMEM-resident, so the second
    # pass is cheap) to avoid E[x^2]-E[x]^2 cancellation.
    n = jnp.float32(B * l_valid)
    if l_valid == Lp:
        mean = jnp.sum(acc, axis=(0, 2), keepdims=True) / n       # (1, tC, 1)
        d = acc - mean
        var = jnp.sum(d * d, axis=(0, 2), keepdims=True) / n
    else:
        stat_mask = (lane < l_valid).astype(jnp.float32)           # (1, 1, Lp)
        mean = jnp.sum(acc * stat_mask, axis=(0, 2), keepdims=True) / n
        d = acc - mean
        var = jnp.sum(d * d * stat_mask, axis=(0, 2), keepdims=True) / n

    scale = gamma_ref[...].astype(jnp.float32) * jax.lax.rsqrt(var + BN_EPS)
    beta = beta_ref[...].astype(jnp.float32)

    # Folded affine + ReLU.
    o_ref[...] = jnp.maximum(d * scale + beta, 0.0).astype(o_ref.dtype)


def _tpu_vmem_capacity_bytes():
    """Trace-time VMEM capacity query, with a conservative (v7x-safe) fallback."""
    try:
        info = pltpu.get_tpu_info()
        cap = getattr(info, "vmem_capacity_bytes", None)
        if cap:
            return int(cap)
    except Exception:
        pass
    return 64 << 20  # v7x per-TC VMEM; safe lower bound for all generations


def _pick_channel_tile(C, B, L_pad, itemsize, budget_bytes):
    """Largest channel tile that (a) divides C, (b) respects dtype-aware
    sublane packing (8 for f32, 16 for bf16, 32 for int8), (c) keeps at least
    2 grid steps when C >= 16 (so v7x's 2 TensorCores both get work), and
    (d) keeps the per-step working set inside `budget_bytes`.

    Working-set estimate per element: double-buffered input + output at the
    I/O dtype (4 * itemsize) plus ~5 block-sized f32 temps in-kernel
    (x cast, acc, rolled, centered d, output staging)."""
    sub = max(8, 32 // itemsize)
    cap = C // 2 if C >= 16 else C
    candidates = [c for c in range(cap, 0, -1)
                  if C % c == 0 and (c % sub == 0 or c == C)]
    if not candidates:  # no sublane-aligned divisor; accept any divisor
        candidates = [c for c in range(cap, 0, -1) if C % c == 0]
    bytes_per_elem = 4 * itemsize + 5 * 4
    for tc in candidates:
        if B * tc * L_pad * bytes_per_elem <= budget_bytes:
            return tc
    raise ValueError(
        "Normal_DWBlock Pallas kernel: per-channel-tile working set "
        f"({B}x{candidates[-1]}x{L_pad} elems) exceeds the VMEM budget "
        f"({budget_bytes} B). "
        # TODO(synk): add a B-axis grid with scratch-accumulated BN stats.
        "B/L tiling is not implemented.")


def normal_dwblock_forward(x, conv_w, conv_b, bn_gamma, bn_beta, window_size,
                           *, channel_tile=None):
    """Forward pass of Normal_DWBlock (dynamic=False).

    x: (B, C, L). conv_w: (C, K). conv_b / bn_gamma / bn_beta: (C,).
    conv_b is accepted for interface parity but is a mathematical no-op under
    batch-statistics BatchNorm (it cancels in the mean), so it is not used.
    """
    del conv_b  # exactly cancelled by train-mode BN mean subtraction
    B, C, L = x.shape
    K = window_size
    assert K % 2 == 1, "odd window_size keeps output length == input length"
    assert conv_w.shape == (C, K)
    assert K // 2 < L, "halo (K//2) must be smaller than the sequence length"

    # Lane-dense output: pad L up to a multiple of 128 (full vst stores).
    L_pad = ((L + 127) // 128) * 128
    x_in = x if L_pad == L else jnp.pad(x, ((0, 0), (0, 0), (0, L_pad - L)))

    vmem_cap = _tpu_vmem_capacity_bytes()
    budget = max(8 << 20, min(vmem_cap // 5, 32 << 20))       # per-step working set
    vmem_limit = max(32 << 20, min(vmem_cap // 2, 64 << 20))  # scoped VMEM limit

    tC = channel_tile if channel_tile is not None else _pick_channel_tile(
        C, B, L_pad, x.dtype.itemsize, budget)
    assert C % tC == 0

    w = conv_w.reshape(1, C, K)
    g = bn_gamma.reshape(1, C, 1)
    bt = bn_beta.reshape(1, C, 1)

    flops = B * C * L * (2 * K + 8)
    bytes_accessed = ((x_in.size + w.size + g.size + bt.size) * x.dtype.itemsize
                      + B * C * L_pad * x.dtype.itemsize)

    kernel = functools.partial(dwblock_kernel, l_valid=L)

    out = pl.pallas_call(
        kernel,
        out_shape=jax.ShapeDtypeStruct((B, C, L_pad), x.dtype),
        grid_spec=pltpu.PrefetchScalarGridSpec(
            num_scalar_prefetch=0,
            grid=(C // tC,),
            in_specs=[
                pl.BlockSpec((B, tC, L_pad), lambda c: (0, c, 0)),
                pl.BlockSpec((1, tC, K), lambda c: (0, c, 0)),
                pl.BlockSpec((1, tC, 1), lambda c: (0, c, 0)),
                pl.BlockSpec((1, tC, 1), lambda c: (0, c, 0)),
            ],
            out_specs=pl.BlockSpec((B, tC, L_pad), lambda c: (0, c, 0)),
        ),
        compiler_params=pltpu.CompilerParams(
            dimension_semantics=("parallel",),
            vmem_limit_bytes=vmem_limit,
        ),
        cost_estimate=pl.CostEstimate(
            flops=flops, transcendentals=C, bytes_accessed=bytes_accessed),
    )(x_in, w, g, bt)

    if L_pad != L:
        out = out[:, :, :L]
    return out


def reference_forward(x, conv_w, conv_b, bn_gamma, bn_beta, window_size):
    """Pure-JAX reference (keeps the conv bias to demonstrate it cancels)."""
    B, C, L = x.shape
    K = window_size
    pad = K // 2
    xp = jnp.pad(x.astype(jnp.float32), ((0, 0), (0, 0), (pad, pad)))
    acc = jnp.zeros((B, C, L), jnp.float32)
    for k in range(K):
        acc = acc + xp[:, :, k:k + L] * conv_w[None, :, k:k + 1]
    acc = acc + conv_b[None, :, None]
    mean = jnp.mean(acc, axis=(0, 2), keepdims=True)
    var = jnp.mean((acc - mean) ** 2, axis=(0, 2), keepdims=True)
    y = (acc - mean) * jax.lax.rsqrt(var + BN_EPS)
    y = y * bn_gamma[None, :, None] + bn_beta[None, :, None]
    return jnp.maximum(y, 0.0)


def _run_case(key, B, dim, L, window_size):
    k_x, k_w, k_b = jax.random.split(key, 3)
    x = jax.random.normal(k_x, (B, dim, L), dtype=jnp.float32)

    # Synthetic params mimicking nn.Conv1d(dim, dim, K, groups=dim) and
    # nn.BatchNorm1d(dim) default init.
    fan_in = window_size  # depthwise: in_channels/groups * K = 1 * K
    bound = 1.0 / (fan_in ** 0.5)
    conv_w = jax.random.uniform(k_w, (dim, window_size), jnp.float32, -bound, bound)
    conv_b = jax.random.uniform(k_b, (dim,), jnp.float32, -bound, bound)
    bn_gamma = jnp.ones((dim,), jnp.float32)
    bn_beta = jnp.zeros((dim,), jnp.float32)

    out = normal_dwblock_forward(x, conv_w, conv_b, bn_gamma, bn_beta, window_size)
    out = jax.block_until_ready(out)
    ref = reference_forward(x, conv_w, conv_b, bn_gamma, bn_beta, window_size)

    assert out.shape == (B, dim, L)
    assert bool(jnp.all(out >= 0.0))
    max_err = float(jnp.max(jnp.abs(out - ref)))
    assert bool(jnp.allclose(out, ref, rtol=1e-4, atol=1e-4)), max_err


if __name__ == "__main__":
    key = jax.random.PRNGKey(0)
    k1, k2 = jax.random.split(key)

    # dim=16 channels, window_size=3, batch=2:
    #   L=128  -> lane-dense path, auto channel tile 8 -> grid=(2,)
    _run_case(k1, B=2, dim=16, L=128, window_size=3)
    #   L=100  -> exercises the L-padding + masked-stats path
    _run_case(k2, B=2, dim=16, L=100, window_size=3)

    print("KERNEL_OK")
</pallas_src>

<mosaic_0001>
module attributes {stable_mosaic.version = 11 : i64} {
  func.func @dwblock_kernel(%arg0: i32, %arg1: memref<2x8x128xf32, #tpu.memory_space<vmem>>, %arg2: memref<1x8x3xf32, #tpu.memory_space<vmem>>, %arg3: memref<1x8x1xf32, #tpu.memory_space<vmem>>, %arg4: memref<1x8x1xf32, #tpu.memory_space<vmem>>, %arg5: memref<2x8x128xf32, #tpu.memory_space<vmem>>) attributes {dimension_semantics = [#tpu.dimension_semantics<parallel>], iteration_bounds = array<i64: 2>, scalar_prefetch = 0 : i64, scratch_operands = 0 : i64, tpu.core_type = #tpu.core_type<tc>, window_params = [{transform_indices = @transform_0, window_bounds = array<i64: 2, 8, 128>}, {transform_indices = @transform_1, window_bounds = array<i64: 1, 8, 3>}, {transform_indices = @transform_2, window_bounds = array<i64: 1, 8, 1>}, {transform_indices = @transform_3, window_bounds = array<i64: 1, 8, 1>}, {transform_indices = @transform_4, window_bounds = array<i64: 2, 8, 128>}]} {
    %c0 = arith.constant 0 : index
    %c0_0 = arith.constant 0 : index
    %c0_1 = arith.constant 0 : index
    %0 = vector.load %arg1[%c0, %c0_0, %c0_1] : memref<2x8x128xf32, #tpu.memory_space<vmem>>, vector<2x8x128xf32>
    %c0_2 = arith.constant 0 : index
    %c0_3 = arith.constant 0 : index
    %c0_4 = arith.constant 0 : index
    %1 = vector.load %arg2[%c0_2, %c0_3, %c0_4] : memref<1x8x3xf32, #tpu.memory_space<vmem>>, vector<1x8x3xf32>
    %2 = tpu.iota {dimensions = array<i32: 2>} : vector<1x1x128xi32>
    %cst = arith.constant 0.000000e+00 : f32
    %3 = vector.broadcast %cst : f32 to vector<2x8x128xf32>
    %4 = vector.extract_strided_slice %1 {offsets = [0, 0, 0], sizes = [1, 8, 1], strides = [1, 1, 1]} : vector<1x8x3xf32> to vector<1x8x1xf32>
    %c1_i32 = arith.constant 1 : i32
    %5 = tpu.dynamic_rotate %0 by %c1_i32 dim 2 : vector<2x8x128xf32>, i32 -> vector<2x8x128xf32>
    %c-1_i32 = arith.constant -1 : i32
    %6 = vector.broadcast %c-1_i32 : i32 to vector<1x1x128xi32>
    %7 = arith.addi %2, %6 : vector<1x1x128xi32>
    %c0_i32 = arith.constant 0 : i32
    %8 = vector.broadcast %c0_i32 : i32 to vector<1x1x128xi32>
    %9 = arith.cmpi sge, %7, %8 : vector<1x1x128xi32>
    %c-1_i32_5 = arith.constant -1 : i32
    %10 = vector.broadcast %c-1_i32_5 : i32 to vector<1x1x128xi32>
    %11 = arith.addi %2, %10 : vector<1x1x128xi32>
    %c128_i32 = arith.constant 128 : i32
    %12 = vector.broadcast %c128_i32 : i32 to vector<1x1x128xi32>
    %13 = arith.cmpi slt, %11, %12 : vector<1x1x128xi32>
    %14 = arith.andi %9, %13 : vector<1x1x128xi1>
    %cst_6 = arith.constant 1.000000e+00 : f32
    %cst_7 = arith.constant 0.000000e+00 : f32
    %15 = vector.broadcast %cst_6 : f32 to vector<1x1x128xf32>
    %16 = vector.broadcast %cst_7 : f32 to vector<1x1x128xf32>
    %17 = arith.select %14, %15, %16 : vector<1x1x128xi1>, vector<1x1x128xf32>
    %18 = vector.broadcast %17 : vector<1x1x128xf32> to vector<1x8x128xf32>
    %19 = vector.broadcast %4 : vector<1x8x1xf32> to vector<1x8x128xf32>
    %20 = arith.mulf %18, %19 : vector<1x8x128xf32>
    %21 = vector.broadcast %20 : vector<1x8x128xf32> to vector<2x8x128xf32>
    %22 = arith.mulf %5, %21 : vector<2x8x128xf32>
    %23 = arith.addf %3, %22 : vector<2x8x128xf32>
    %24 = vector.extract_strided_slice %1 {offsets = [0, 0, 1], sizes = [1, 8, 1], strides = [1, 1, 1]} : vector<1x8x3xf32> to vector<1x8x1xf32>
    %25 = vector.broadcast %24 : vector<1x8x1xf32> to vector<2x8x128xf32>
    %26 = arith.mulf %0, %25 : vector<2x8x128xf32>
    %27 = arith.addf %23, %26 : vector<2x8x128xf32>
    %28 = vector.extract_strided_slice %1 {offsets = [0, 0, 2], sizes = [1, 8, 1], strides = [1, 1, 1]} : vector<1x8x3xf32> to vector<1x8x1xf32>
    %c127_i32 = arith.constant 127 : i32
    %29 = tpu.dynamic_rotate %0 by %c127_i32 dim 2 : vector<2x8x128xf32>, i32 -> vector<2x8x128xf32>
    %c1_i32_8 = arith.constant 1 : i32
    %30 = vector.broadcast %c1_i32_8 : i32 to vector<1x1x128xi32>
    %31 = arith.addi %2, %30 : vector<1x1x128xi32>
    %c0_i32_9 = arith.constant 0 : i32
    %32 = vector.broadcast %c0_i32_9 : i32 to vector<1x1x128xi32>
    %33 = arith.cmpi sge, %31, %32 : vector<1x1x128xi32>
    %c1_i32_10 = arith.constant 1 : i32
    %34 = vector.broadcast %c1_i32_10 : i32 to vector<1x1x128xi32>
    %35 = arith.addi %2, %34 : vector<1x1x128xi32>
    %c128_i32_11 = arith.constant 128 : i32
    %36 = vector.broadcast %c128_i32_11 : i32 to vector<1x1x128xi32>
    %37 = arith.cmpi slt, %35, %36 : vector<1x1x128xi32>
    %38 = arith.andi %33, %37 : vector<1x1x128xi1>
    %cst_12 = arith.constant 1.000000e+00 : f32
    %cst_13 = arith.constant 0.000000e+00 : f32
    %39 = vector.broadcast %cst_12 : f32 to vector<1x1x128xf32>
    %40 = vector.broadcast %cst_13 : f32 to vector<1x1x128xf32>
    %41 = arith.select %38, %39, %40 : vector<1x1x128xi1>, vector<1x1x128xf32>
    %42 = vector.broadcast %41 : vector<1x1x128xf32> to vector<1x8x128xf32>
    %43 = vector.broadcast %28 : vector<1x8x1xf32> to vector<1x8x128xf32>
    %44 = arith.mulf %42, %43 : vector<1x8x128xf32>
    %45 = vector.broadcast %44 : vector<1x8x128xf32> to vector<2x8x128xf32>
    %46 = arith.mulf %29, %45 : vector<2x8x128xf32>
    %47 = arith.addf %27, %46 : vector<2x8x128xf32>
    %cst_14 = arith.constant dense<0.000000e+00> : vector<8xf32>
    %48 = vector.multi_reduction <add>, %47, %cst_14 [0, 2] : vector<2x8x128xf32> to vector<8xf32>
    %49 = vector.shape_cast %48 : vector<8xf32> to vector<1x8x1xf32>
    %cst_15 = arith.constant 2.560000e+02 : f32
    %50 = vector.broadcast %cst_15 : f32 to vector<1x8x1xf32>
    %51 = arith.divf %49, %50 : vector<1x8x1xf32>
    %52 = vector.broadcast %51 : vector<1x8x1xf32> to vector<2x8x128xf32>
    %53 = arith.subf %47, %52 : vector<2x8x128xf32>
    %54 = arith.mulf %53, %53 : vector<2x8x128xf32>
    %cst_16 = arith.constant dense<0.000000e+00> : vector<8xf32>
    %55 = vector.multi_reduction <add>, %54, %cst_16 [0, 2] : vector<2x8x128xf32> to vector<8xf32>
    %56 = vector.shape_cast %55 : vector<8xf32> to vector<1x8x1xf32>
    %cst_17 = arith.constant 2.560000e+02 : f32
    %57 = vector.broadcast %cst_17 : f32 to vector<1x8x1xf32>
    %58 = arith.divf %56, %57 : vector<1x8x1xf32>
    %c0_18 = arith.constant 0 : index
    %c0_19 = arith.constant 0 : index
    %c0_20 = arith.constant 0 : index
    %59 = vector.load %arg3[%c0_18, %c0_19, %c0_20] : memref<1x8x1xf32, #tpu.memory_space<vmem>>, vector<1x8x1xf32>
    %cst_21 = arith.constant 9.99999974E-6 : f32
    %60 = vector.broadcast %cst_21 : f32 to vector<1x8x1xf32>
    %61 = arith.addf %58, %60 : vector<1x8x1xf32>
    %62 = math.rsqrt %61 : vector<1x8x1xf32>
    %63 = arith.mulf %59, %62 : vector<1x8x1xf32>
    %c0_22 = arith.constant 0 : index
    %c0_23 = arith.constant 0 : index
    %c0_24 = arith.constant 0 : index
    %64 = vector.load %arg4[%c0_22, %c0_23, %c0_24] : memref<1x8x1xf32, #tpu.memory_space<vmem>>, vector<1x8x1xf32>
    %65 = vector.broadcast %63 : vector<1x8x1xf32> to vector<2x8x128xf32>
    %66 = arith.mulf %53, %65 : vector<2x8x128xf32>
    %67 = vector.broadcast %64 : vector<1x8x1xf32> to vector<2x8x128xf32>
    %68 = arith.addf %66, %67 : vector<2x8x128xf32>
    %cst_25 = arith.constant 0.000000e+00 : f32
    %69 = vector.broadcast %cst_25 : f32 to vector<2x8x128xf32>
    %70 = arith.maximumf %68, %69 : vector<2x8x128xf32>
    %c0_26 = arith.constant 0 : index
    %c0_27 = arith.constant 0 : index
    %c0_28 = arith.constant 0 : index
    %71 = vector.load %arg5[%c0_26, %c0_27, %c0_28] : memref<2x8x128xf32, #tpu.memory_space<vmem>>, vector<2x8x128xf32>
    tpu.vector_store %arg5[%c0_26, %c0_27, %c0_28], %70 {strides = array<i32>} : memref<2x8x128xf32, #tpu.memory_space<vmem>>, vector<2x8x128xf32>,
    return
  }
  func.func @transform_0(%arg0: i32) -> (i32, i32, i32) {
    %c0_i32 = arith.constant 0 : i32
    %c0_i32_0 = arith.constant 0 : i32
    %c0_i32_1 = arith.constant 0 : i32
    return %c0_i32, %arg0, %c0_i32_0 : i32, i32, i32
  }
  func.func @transform_1(%arg0: i32) -> (i32, i32, i32) {
    %c0_i32 = arith.constant 0 : i32
    %c0_i32_0 = arith.constant 0 : i32
    %c0_i32_1 = arith.constant 0 : i32
    return %c0_i32, %arg0, %c0_i32_0 : i32, i32, i32
  }
  func.func @transform_2(%arg0: i32) -> (i32, i32, i32) {
    %c0_i32 = arith.constant 0 : i32
    %c0_i32_0 = arith.constant 0 : i32
    %c0_i32_1 = arith.constant 0 : i32
    return %c0_i32, %arg0, %c0_i32_0 : i32, i32, i32
  }
  func.func @transform_3(%arg0: i32) -> (i32, i32, i32) {
    %c0_i32 = arith.constant 0 : i32
    %c0_i32_0 = arith.constant 0 : i32
    %c0_i32_1 = arith.constant 0 : i32
    return %c0_i32, %arg0, %c0_i32_0 : i32, i32, i32
  }
  func.func @transform_4(%arg0: i32) -> (i32, i32, i32) {
    %c0_i32 = arith.constant 0 : i32
    %c0_i32_0 = arith.constant 0 : i32
    %c0_i32_1 = arith.constant 0 : i32
    return %c0_i32, %arg0, %c0_i32_0 : i32, i32, i32
  }
}

</mosaic_0001>

<llo_original>
// kernel: tpu_custom_call.1
$region0: #{tpu_custom_call.1}
  #allocation0 [shape = 'u32[]', space=smem, size = 0x4, offset = 0x4, fixed_abs, tag = 'smem constant byte address 0x4 - core index']
  #allocation1 [shape = 'u32[72,128]{1,0:T(1,128)}', space=vmem, size = 0x9000, scoped, tag = 'internal scratch']
  %s0 = inlined_call_operand.vmem [shape: f32[2,16,128], index: 0, kind: input, shape index: {}]
  %s1 = inlined_call_operand.vmem [shape: f32[1,16,3], index: 1, kind: input, shape index: {}]
  %s2 = inlined_call_operand.vmem [shape: f32[1,16,1], index: 2, kind: input, shape index: {}]
  %s3 = inlined_call_operand.vmem [shape: f32[1,16,1], index: 3, kind: input, shape index: {}]
  %s4 = inlined_call_operand.hbm [shape: f32[2,16,128], index: 4, kind: output, shape index: {}]
  %s5 = sld [smem:[#allocation0]]
  $region87: #{tpu_custom_call.1} parent=0
    _
  %s7 = ssub.s32 1, %s5
  %s8 = scalar_select 0, %s7, %s5
  $region1: #{tpu_custom_call.1} parent=0
    #allocation2 [shape = 'u8[16384]{0}', space=vmem, size = 0x4000, scoped, tag = 'input window, operand 0']
    #allocation3 [shape = 'u8[16384]{0}', space=vmem, size = 0x4000, scoped, tag = 'output window, operand 0']
    #allocation4 [shape = 's32[2]{0}', space=sflag, size = 0x8, scoped, tag = 'scoped memory for tpu_custom_call.1']
    %9 = vsyncpa [#allocation4], 0
    %s10 = scalar_lea.sflag [#allocation4], 1
    %11 = vsyncpa %s10, 0
    loop: start=0, step=1, limit=4
    $region2: #{tpu_custom_call.1} parent=1 // loop_pre_header
      _
    $region3: #{tpu_custom_call.1} parent=1 // loop_header
      %s13 = sphi 0, %s17
      %p14 = scmp.ge.s32.totalorder %s13, 4
      %s23 = sphi 0, %s25
      %s26 = sphi 0, %s23
      %s27 = sphi 0, %s26
      %s43 = sphi 0, %s27
      %s49 = sphi 0, %s51
      %s52 = sphi 0, %s49
      %s53 = sphi 0, %s52
      %s69 = sphi 0, %s53
      %s75 = sphi 0, %s77
      %s78 = sphi 0, %s75
      %s79 = sphi 0, %s78
      %s95 = sphi 0, %s79
      %s101 = sphi 0, %s103
      %s104 = sphi 0, %s101
      %s105 = sphi 0, %s104
      %s121 = sphi 0, %s105
      %s127 = sphi 0, %s129
      %s130 = sphi 0, %s127
      %s131 = sphi 0, %s130
      %s147 = sphi 0, %s131
    $region4: #{tpu_custom_call.1} parent=1 // loop_header_branch
      %16 = sbr.rel (%p14) target = $region8
    $region5: #{tpu_custom_call.1} parent=1 // loop_body
      %s18 = ssub.s32 %s13, 1
      %s19 = ssub.s32 %s13, 2
      %s20 = sadd.s32 %s13, 1
      %s21 = ssub.s32 %s13, %s20
      %p22 = scmp.eq.s32.totalorder %s21, 0
      %s24 = sadd.s32 %s23, 1
      %s25 = scalar_select %p22, %s23, %s24
      %p28 = pneg %p22
      %p29 = scmp.eq.s32.totalorder %s13, 1
      %p30 = por %p28, %p29
      %p31 = scmp.ne.s32.totalorder %s23, %s26
      %p32 = scmp.eq.s32.totalorder %s13, 0
      %p33 = por %p31, %p32
      %p34 = scmp.ne.s32.totalorder %s23, %s26
      %p35 = scmp.eq.s32.totalorder %s18, 1
      %p36 = por %p34, %p35
      %p37 = scmp.ne.s32.totalorder %s26, %s27
      %p38 = scmp.eq.s32.totalorder %s18, 0
      %p39 = por %p37, %p38
      %p40 = scmp.ne.s32.totalorder %s26, %s27
      %p41 = scmp.eq.s32.totalorder %s19, 1
      %p42 = por %p40, %p41
      %p44 = scmp.ne.s32.totalorder %s27, %s43
      %p45 = scmp.eq.s32.totalorder %s19, 0
      %p46 = por %p44, %p45
      %s47 = ssub.s32 %s13, %s20
      %p48 = scmp.eq.s32.totalorder %s47, 0
      %s50 = sadd.s32 %s49, 1
      %s51 = scalar_select %p48, %s49, %s50
      %p54 = pneg %p48
      %p55 = scmp.eq.s32.totalorder %s13, 1
      %p56 = por %p54, %p55
      %p57 = scmp.ne.s32.totalorder %s49, %s52
      %p58 = scmp.eq.s32.totalorder %s13, 0
      %p59 = por %p57, %p58
      %p60 = scmp.ne.s32.totalorder %s49, %s52
      %p61 = scmp.eq.s32.totalorder %s18, 1
      %p62 = por %p60, %p61
      %p63 = scmp.ne.s32.totalorder %s52, %s53
      %p64 = scmp.eq.s32.totalorder %s18, 0
      %p65 = por %p63, %p64
      %p66 = scmp.ne.s32.totalorder %s52, %s53
      %p67 = scmp.eq.s32.totalorder %s19, 1
      %p68 = por %p66, %p67
      %p70 = scmp.ne.s32.totalorder %s53, %s69
      %p71 = scmp.eq.s32.totalorder %s19, 0
      %p72 = por %p70, %p71
      %s73 = ssub.s32 %s13, %s20
      %p74 = scmp.eq.s32.totalorder %s73, 0
      %s76 = sadd.s32 %s75, 1
      %s77 = scalar_select %p74, %s75, %s76
      %p80 = pneg %p74
      %p81 = scmp.eq.s32.totalorder %s13, 1
      %p82 = por %p80, %p81
      %p83 = scmp.ne.s32.totalorder %s75, %s78
      %p84 = scmp.eq.s32.totalorder %s13, 0
      %p85 = por %p83, %p84
      %p86 = scmp.ne.s32.totalorder %s75, %s78
      %p87 = scmp.eq.s32.totalorder %s18, 1
      %p88 = por %p86, %p87
      %p89 = scmp.ne.s32.totalorder %s78, %s79
      %p90 = scmp.eq.s32.totalorder %s18, 0
      %p91 = por %p89, %p90
      %p92 = scmp.ne.s32.totalorder %s78, %s79
      %p93 = scmp.eq.s32.totalorder %s19, 1
      %p94 = por %p92, %p93
      %p96 = scmp.ne.s32.totalorder %s79, %s95
      %p97 = scmp.eq.s32.totalorder %s19, 0
      %p98 = por %p96, %p97
      %s99 = ssub.s32 %s13, %s20
      %p100 = scmp.eq.s32.totalorder %s99, 0
      %s102 = sadd.s32 %s101, 1
      %s103 = scalar_select %p100, %s101, %s102
      %p106 = pneg %p100
      %p107 = scmp.eq.s32.totalorder %s13, 1
      %p108 = por %p106, %p107
      %p109 = scmp.ne.s32.totalorder %s101, %s104
      %p110 = scmp.eq.s32.totalorder %s13, 0
      %p111 = por %p109, %p110
      %p112 = scmp.ne.s32.totalorder %s101, %s104
      %p113 = scmp.eq.s32.totalorder %s18, 1
      %p114 = por %p112, %p113
      %p115 = scmp.ne.s32.totalorder %s104, %s105
      %p116 = scmp.eq.s32.totalorder %s18, 0
      %p117 = por %p115, %p116
      %p118 = scmp.ne.s32.totalorder %s104, %s105
      %p119 = scmp.eq.s32.totalorder %s19, 1
      %p120 = por %p118, %p119
      %p122 = scmp.ne.s32.totalorder %s105, %s121
      %p123 = scmp.eq.s32.totalorder %s19, 0
      %p124 = por %p122, %p123
      %s125 = ssub.s32 %s13, %s20
      %p126 = scmp.eq.s32.totalorder %s125, 0
      %s128 = sadd.s32 %s127, 1
      %s129 = scalar_select %p126, %s127, %s128
      %p132 = pneg %p126
      %p133 = scmp.eq.s32.totalorder %s13, 1
      %p134 = por %p132, %p133
      %p135 = scmp.ne.s32.totalorder %s127, %s130
      %p136 = scmp.eq.s32.totalorder %s13, 0
      %p137 = por %p135, %p136
      %p138 = scmp.ne.s32.totalorder %s127, %s130
      %p139 = scmp.eq.s32.totalorder %s18, 1
      %p140 = por %p138, %p139
      %p141 = scmp.ne.s32.totalorder %s130, %s131
      %p142 = scmp.eq.s32.totalorder %s18, 0
      %p143 = por %p141, %p142
      %p144 = scmp.ne.s32.totalorder %s130, %s131
      %p145 = scmp.eq.s32.totalorder %s19, 1
      %p146 = por %p144, %p145
      %p148 = scmp.ne.s32.totalorder %s131, %s147
      %p149 = scmp.eq.s32.totalorder %s19, 0
      %p150 = por %p148, %p149
      %p151 = scmp.le.s32.totalorder 1, %s13
      %p152 = scmp.lt.s32.totalorder %s13, 3
      %p153 = pnand %p151, %p152
      %p154 = pneg %p153
      // Predicated region
      $region9: #{tpu_custom_call.1} parent=5 // pred_check
        _
      $region10: #{tpu_custom_call.1} parent=5 // pred_check_branch
        %156 = sbr.rel (%p153) target = $region12
      $region11: #{tpu_custom_call.1} parent=5 // pred_region
        %s157 = ssub.s32 %s13, 1
      $region12: #{tpu_custom_call.1} parent=5 // pred_fallthru
        _
      %p158 = scmp.lt.s32.totalorder %s13, 2
      // Predicated region
      $region13: #{tpu_custom_call.1} parent=5 // pred_check
        %p159 = pneg %p158
      $region14: #{tpu_custom_call.1} parent=5 // pred_check_branch
        %161 = sbr.rel (%p159) target = $region16
      $region15: #{tpu_custom_call.1} parent=5 // pred_region
        // Predicated region
        $region17: #{tpu_custom_call.1} parent=15 // pred_check
          %p162 = pneg %p33
        $region18: #{tpu_custom_call.1} parent=15 // pred_check_branch
          %164 = sbr.rel (%p162) target = $region20
        $region19: #{tpu_custom_call.1} parent=15 // pred_region
          %s165 = sand.u32 %s23, 1
          %s166 = sand.u32 %s23, 1
          %s167 = smul.addr %s166, 16
          %s168 = scalar_lea.vmem [#allocation2], %s167
          %s169 = smul.addr %s13, 8
          %s170 = scalar_lea.vmem %s0, %s169
          // Predicated region
          $region21: #{tpu_custom_call.1} parent=19 // pred_check
            _
          $region22: #{tpu_custom_call.1} parent=19 // pred_check_branch
            %172 = sbr.rel (0) target = $region24
          $region23: #{tpu_custom_call.1} parent=19 // pred_region
            // Predicated region
            $region25: #{tpu_custom_call.1} parent=23 // pred_check
              _
            $region26: #{tpu_custom_call.1} parent=23 // pred_check_branch
              %174 = sbr.rel (0) target = $region28
            $region27: #{tpu_custom_call.1} parent=23 // pred_region
              // Predicated region
              $region40: #{tpu_custom_call.1} parent=27 // pred_check
                _
              $region41: #{tpu_custom_call.1} parent=27 // pred_check_branch
                %192 = sbr.rel (0) target = $region43
              $region42: #{tpu_custom_call.1} parent=27 // pred_region
                loop: start=0, step=1, limit=1
                $region44: #{tpu_custom_call.1} parent=42 // loop_pre_header
                  _
                $region45: #{tpu_custom_call.1} parent=42 // loop_header
                  %s194 = sphi 0, %s198
                  %p195 = scmp.ge.s32.totalorder %s194, 1
                  %s199 = sphi %s170, %s170
                  %s200 = sphi %s168, %s168
                $region46: #{tpu_custom_call.1} parent=42 // loop_header_branch
                  %197 = sbr.rel (%p195) target = $region50
                $region47: #{tpu_custom_call.1} parent=42 // loop_body
                  %v201 = vld [vmem:[%s199] sm:$0xff]
                  %202 = vst [vmem:[%s200] sm:$0xff] %v201
                  %v203 = vld [vmem:[%s199 + $0x10] sm:$0xff]
                  %204 = vst [vmem:[%s200 + $0x8] sm:$0xff] %v203
                $region48: #{tpu_custom_call.1} parent=42 // loop_footer
                  %s198 = sadd.s32 1, %s194
                $region49: #{tpu_custom_call.1} parent=42 // loop_footer_branch
                  %193 = sbr.rel target = $region45
                $region50: #{tpu_custom_call.1} parent=42 // loop_exit
                  _
              $region43: #{tpu_custom_call.1} parent=27 // pred_fallthru
                _
              // Predicated region
              $region51: #{tpu_custom_call.1} parent=27 // pred_check
                _
              $region52: #{tpu_custom_call.1} parent=27 // pred_check_branch
                %206 = sbr.rel target = $region54
              $region53: #{tpu_custom_call.1} parent=27 // pred_region
                _
              $region54: #{tpu_custom_call.1} parent=27 // pred_fallthru
                _
            $region28: #{tpu_custom_call.1} parent=23 // pred_fallthru
              _
            // Predicated region
            $region29: #{tpu_custom_call.1} parent=23 // pred_check
              _
            $region30: #{tpu_custom_call.1} parent=23 // pred_check_branch
              %176 = sbr.rel target = $region32
            $region31: #{tpu_custom_call.1} parent=23 // pred_region
              %s178 = ssub.s32 256, 1
              loop: start=0, step=1, limit=1
              $region33: #{tpu_custom_call.1} parent=31 // loop_pre_header
                _
              $region34: #{tpu_custom_call.1} parent=31 // loop_header
                %s180 = sphi 0, %s184
                %p181 = scmp.ge.s32.totalorder %s180, 1
                %s185 = sphi %s170, %s170
                %s186 = sphi %s168, %s168
              $region35: #{tpu_custom_call.1} parent=31 // loop_header_branch
                %183 = sbr.rel (%p181) target = $region39
              $region36: #{tpu_custom_call.1} parent=31 // loop_body
                %v187 = vld [vmem:[%s185] sm:%s178]
                %188 = vst [vmem:[%s186] sm:%s178] %v187
                %v189 = vld [vmem:[%s185 + $0x10] sm:%s178]
                %190 = vst [vmem:[%s186 + $0x8] sm:%s178] %v189
              $region37: #{tpu_custom_call.1} parent=31 // loop_footer
                %s184 = sadd.s32 1, %s180
              $region38: #{tpu_custom_call.1} parent=31 // loop_footer_branch
                %179 = sbr.rel target = $region34
              $region39: #{tpu_custom_call.1} parent=31 // loop_exit
                _
            $region32: #{tpu_custom_call.1} parent=23 // pred_fallthru
              _
          $region24: #{tpu_custom_call.1} parent=19 // pred_fallthru
            _
          %207 = vnop
        $region20: #{tpu_custom_call.1} parent=15 // pred_fallthru
          _
        // Predicated region
        $region55: #{tpu_custom_call.1} parent=15 // pred_check
          %p208 = pneg %p59
        $region56: #{tpu_custom_call.1} parent=15 // pred_check_branch
          %210 = sbr.rel (%p208) target = $region58
        $region57: #{tpu_custom_call.1} parent=15 // pred_region
          %p211 = scmp.lt.s32.totalorder %s13, 1
          %s212 = scalar_select %p211, %s13, 1
          %s213 = smul.addr %s212, 8
          %s214 = scalar_lea.vmem %s1, %s213
        $region58: #{tpu_custom_call.1} parent=15 // pred_fallthru
          _
        // Predicated region
        $region59: #{tpu_custom_call.1} parent=15 // pred_check
          %p215 = pneg %p85
        $region60: #{tpu_custom_call.1} parent=15 // pred_check_branch
          %217 = sbr.rel (%p215) target = $region62
        $region61: #{tpu_custom_call.1} parent=15 // pred_region
          %p218 = scmp.lt.s32.totalorder %s13, 1
          %s219 = scalar_select %p218, %s13, 1
          %s220 = smul.addr %s219, 8
          %s221 = scalar_lea.vmem %s2, %s220
        $region62: #{tpu_custom_call.1} parent=15 // pred_fallthru
          _
        // Predicated region
        $region63: #{tpu_custom_call.1} parent=15 // pred_check
          %p222 = pneg %p111
        $region64: #{tpu_custom_call.1} parent=15 // pred_check_branch
          %224 = sbr.rel (%p222) target = $region66
        $region65: #{tpu_custom_call.1} parent=15 // pred_region
          %p225 = scmp.lt.s32.totalorder %s13, 1
          %s226 = scalar_select %p225, %s13, 1
          %s227 = smul.addr %s226, 8
          %s228 = scalar_lea.vmem %s3, %s227
        $region66: #{tpu_custom_call.1} parent=15 // pred_fallthru
          _
      $region16: #{tpu_custom_call.1} parent=5 // pred_fallthru
        _
      %p229 = scmp.le.s32.totalorder 1, %s13
      %p230 = scmp.lt.s32.totalorder %s13, 3
      %p231 = pnand %p229, %p230
      %p232 = pneg %p231
      // Predicated region
      $region67: #{tpu_custom_call.1} parent=5 // pred_check
        _
      $region68: #{tpu_custom_call.1} parent=5 // pred_check_branch
        %234 = sbr.rel (%p231) target = $region70
      $region69: #{tpu_custom_call.1} parent=5 // pred_region
        %s235 = ssub.s32 %s13, 1
        %s236 = sand.u32 %s26, 1
        %s237 = sand.u32 %s26, 1
        %s238 = smul.addr %s237, 16
        %s239 = scalar_lea.vmem [#allocation2], %s238
        // Predicated region
        $region71: #{tpu_custom_call.1} parent=69 // pred_check
          %p240 = pneg %p39
        $region72: #{tpu_custom_call.1} parent=69 // pred_check_branch
          %242 = sbr.rel (%p240) target = $region74
        $region73: #{tpu_custom_call.1} parent=69 // pred_region
          _
        $region74: #{tpu_custom_call.1} parent=69 // pred_fallthru
          _
        %s243 = sand.u32 %s26, 1
        %s244 = sand.u32 %s26, 1
        %s245 = smul.addr %s244, 16
        %s246 = scalar_lea.vmem [#allocation2], %s245
        %p247 = pneg %p39
        %p248 = pneg %p36
        %p249 = scmp.lt.s32.totalorder %s18, 1
        %s250 = scalar_select %p249, %s18, 1
        %s251 = smul.addr %s250, 8
        %s252 = scalar_lea.vmem %s1, %s251
        %p253 = pneg %p65
        %p254 = pneg %p62
        %p255 = scmp.lt.s32.totalorder %s18, 1
        %s256 = scalar_select %p255, %s18, 1
        %s257 = smul.addr %s256, 8
        %s258 = scalar_lea.vmem %s2, %s257
        %p259 = pneg %p91
        %p260 = pneg %p88
        %p261 = scmp.lt.s32.totalorder %s18, 1
        %s262 = scalar_select %p261, %s18, 1
        %s263 = smul.addr %s262, 8
        %s264 = scalar_lea.vmem %s3, %s263
        %p265 = pneg %p117
        %p266 = pneg %p114
        %p267 = pneg %p143
        %p268 = pneg %p140
        %s269 = sand.u32 %s130, 1
        %s270 = scalar_lea.sflag [#allocation4], %s269
        %s271 = sand.u32 %s130, 1
        %s272 = smul.addr %s271, 16
        %s273 = scalar_lea.vmem [#allocation3], %s272
        %p274 = scmp.lt.s32.totalorder %s18, 1
        %s275 = scalar_select %p274, %s18, 1
        %s276 = smul.addr %s275, 8
        %s277 = scalar_lea.vmem %s1, %s276
        %p278 = scmp.lt.s32.totalorder %s18, 1
        %s279 = scalar_select %p278, %s18, 1
        %s280 = smul.addr %s279, 8
        %s281 = scalar_lea.vmem %s2, %s280
        %p282 = scmp.lt.s32.totalorder %s18, 1
        %s283 = scalar_select %p282, %s18, 1
        %s284 = smul.addr %s283, 8
        %s285 = scalar_lea.vmem %s3, %s284
        %v286 = vld [vmem:[%s239] sm:$0xff]
        %v287 = vld [vmem:[%s239 + $0x8] sm:$0xff]
        %v288 = vld [vmem:[%s277] sm:$0xff]
        %v289 = vlaneseq
        %v290 = vand.u32 %v289, 127
        %291 = vrot.lane.b32.xlu0 %v286, 1
        %v292 = vpop.permute.xlu0 %291
        %293 = vrot.lane.b32.xlu0 %v287, 1
        %v294 = vpop.permute.xlu0 %293
        %v295 = vadd.s32 %v290, 4294967295
        %vm296 = vcmp.ge.s32.totalorder %v295, 0
        %vm297 = vcmp.lt.s32.totalorder %v295, 128
        %vm298 = vmand %vm296, %vm297
        %v299 = vsel %vm298, 1.0, 0.0
        %301 = vset.pattern.permute.xlu0 0
        %302 = vperm.xlu0 %301, %v288
        %v303 = vpop.permute.xlu0 %302
        %v305 = vmul.f32 %v299, %v303
        %v306 = vmul.f32 %v292, %v305
        %v307 = vmul.f32 %v294, %v305
        %v308 = vadd.f32 %v306, 0.0
        %v309 = vadd.f32 %v307, 0.0
        %310 = vset.pattern.permute.xlu0 1
        %311 = vperm.xlu0 %310, %v288
        %v312 = vpop.permute.xlu0 %311
        %v314 = vmul.f32 %v286, %v312
        %v315 = vmul.f32 %v287, %v312
        %v316 = vadd.f32 %v308, %v314
        %v317 = vadd.f32 %v309, %v315
        %318 = vrot.lane.b32.xlu0 %v286, 127
        %v319 = vpop.permute.xlu0 %318
        %320 = vrot.lane.b32.xlu0 %v287, 127
        %v321 = vpop.permute.xlu0 %320
        %v322 = vadd.s32 %v290, 1
        %vm323 = vcmp.ge.s32.totalorder %v322, 0
        %vm324 = vcmp.lt.s32.totalorder %v322, 128
        %vm325 = vmand %vm323, %vm324
        %v326 = vsel %vm325, 1.0, 0.0
        %327 = vset.pattern.permute.xlu0 2
        %328 = vperm.xlu0 %327, %v288
        %v329 = vpop.permute.xlu0 %328
        %v331 = vmul.f32 %v326, %v329
        %v332 = vmul.f32 %v319, %v331
        %v333 = vmul.f32 %v321, %v331
        %v334 = vadd.f32 %v316, %v332
        %v335 = vadd.f32 %v317, %v333
        %v336 = vadd.f32 %v334, %v335
        %337 = vadd.xlane.f32.xlu0 %v336
        %v338 = vpop.xlane.xlu0 %337
        %v339 = vrcp.pop 256.0
        %v340 = vmul.f32 256.0, %v339
        %v341 = vsub.f32 1.0, %v340
        %v342 = vmul.f32 %v339, %v341
        %v343 = vadd.f32 %v339, %v342
        %vm344 = vweird.f32 %v339
        %v345 = vsel %vm344, %v339, %v343
        %v346 = vmul.f32 %v338, %v345
        %v347 = vsub.f32 %v334, %v346
        %v348 = vsub.f32 %v335, %v346
        %v349 = vmul.f32 %v347, %v347
        %v350 = vmul.f32 %v348, %v348
        %v351 = vadd.f32 %v349, %v350
        %352 = vadd.xlane.f32.xlu0 %v351
        %v353 = vpop.xlane.xlu0 %352
        %v354 = vmul.f32 %v353, %v345
        %v355 = vld [vmem:[%s281] sm:$0xff]
        %v356 = vadd.f32 %v354, 1e-05
        %v357 = vrsqrt.pop %v356
        %v358 = vmul.f32 %v357, %v356
        %v359 = vmul.f32 %v358, %v357
        %v360 = vmul.f32 0.5, %v359
        %v361 = vsub.f32 1.5, %v360
        %v362 = vmul.f32 %v357, %v361
        %vm363 = vweird.f32 %v356
        %vm364 = vweird.f32 %v357
        %vm365 = vmor %vm363, %vm364
        %v366 = vsel %vm365, %v357, %v362
        %v367 = vmul.f32 %v355, %v366
        %v368 = vld [vmem:[%s285] sm:$0xff]
        %370 = vset.pattern.permute.xlu0 0
        %371 = vperm.xlu0 %370, %v367
        %v372 = vpop.permute.xlu0 %371
        %v374 = vmul.f32 %v347, %v372
        %v375 = vmul.f32 %v348, %v372
        %377 = vset.pattern.permute.xlu0 0
        %378 = vperm.xlu0 %377, %v368
        %v379 = vpop.permute.xlu0 %378
        %v381 = vadd.f32 %v374, %v379
        %v382 = vadd.f32 %v375, %v379
        %v383 = vmax.f32 %v381, 0.0
        %v384 = vmax.f32 %v382, 0.0
        %385 = vst [vmem:[%s273] sm:$0xff] %v383
        %386 = vst [vmem:[%s273 + $0x8] sm:$0xff] %v384
        %s387 = sand.u32 %s130, 1
        %s388 = scalar_lea.sflag [#allocation4], %s387
        %s389 = sand.u32 %s130, 1
        %s390 = smul.addr %s389, 16
        %s391 = scalar_lea.vmem [#allocation3], %s390
        // Predicated region
        $region75: #{tpu_custom_call.1} parent=69 // pred_check
          %p392 = pneg %p140
        $region76: #{tpu_custom_call.1} parent=69 // pred_check_branch
          %394 = sbr.rel (%p392) target = $region78
        $region77: #{tpu_custom_call.1} parent=69 // pred_region
          %396 = vsyncadd %s388, 0
          %s397 = smul.addr %s18, 8
          %s398 = scalar_lea.hbm %s4, %s397
          %s399 = sshll.u32 %s391, 4
          %s400 = int_to_ptr.vmem [resolvable:$true] %s399
          %s401 = sshll.u32 %s398, 4
          %s402 = int_to_ptr.hbm [resolvable:$true] %s401
          %407 = dma.vmem_to_hbm [thread:$0]  %s400, 256, %s402, %s388, 128, 256, 8
        $region78: #{tpu_custom_call.1} parent=69 // pred_fallthru
          _
      $region70: #{tpu_custom_call.1} parent=5 // pred_fallthru
        _
      %p408 = scmp.le.s32.totalorder 2, %s13
      // Predicated region
      $region79: #{tpu_custom_call.1} parent=5 // pred_check
        %p409 = pneg %p408
      $region80: #{tpu_custom_call.1} parent=5 // pred_check_branch
        %411 = sbr.rel (%p409) target = $region82
      $region81: #{tpu_custom_call.1} parent=5 // pred_region
        %s412 = ssub.s32 %s13, 2
        // Predicated region
        $region83: #{tpu_custom_call.1} parent=81 // pred_check
          %p413 = pneg %p146
        $region84: #{tpu_custom_call.1} parent=81 // pred_check_branch
          %415 = sbr.rel (%p413) target = $region86
        $region85: #{tpu_custom_call.1} parent=81 // pred_region
          %s416 = sand.u32 %s131, 1
          %s417 = scalar_lea.sflag [#allocation4], %s416
          %s418 = sand.u32 %s131, 1
          %s419 = smul.addr %s418, 16
          %s420 = scalar_lea.vmem [#allocation3], %s419
          %422 = dma.done %s417, 256
        $region86: #{tpu_custom_call.1} parent=81 // pred_fallthru
          _
      $region82: #{tpu_custom_call.1} parent=5 // pred_fallthru
        _
    $region6: #{tpu_custom_call.1} parent=1 // loop_footer
      %s17 = sadd.s32 1, %s13
    $region7: #{tpu_custom_call.1} parent=1 // loop_footer_branch
      %12 = sbr.rel target = $region3
    $region8: #{tpu_custom_call.1} parent=1 // loop_exit
      _
    %423 = vsyncpa [#allocation4], 1
    %s424 = scalar_lea.sflag [#allocation4], 1
    %425 = vsyncpa %s424, 1

</llo_original>
